<compile_context>
chip_gen: v6e
topology: v6e:2x2x1
jax: 0.10.0
libtpu: 0.0.40
codegen_flags: <defaults>
</compile_context>

<pallas_src>
import functools

import jax
import jax.numpy as jnp
from jax.experimental import pallas as pl
from jax.experimental.pallas import tpu as pltpu

LANE = 128


def _round_up(x, m):
    return ((x + m - 1) // m) * m


# ---------------------------------------------------------------------------
# Fused Pallas kernel: all GCN layers (+ ReLU) and the Linear head in one call.
# ---------------------------------------------------------------------------
def tag_fused_kernel(a_ref, x_ref, w_ref, b_ref, lwt_ref, lb_ref,
                     out_ref, head_ref, *, num_layers):
    # H starts as the (padded) node features and stays on-chip for the whole
    # forward -- no HBM round trips between layers.
    h = x_ref[...].astype(jnp.float32)
    for l in range(num_layers):  # static unroll; num_layers is small & fixed
        # A_hat @ (H @ W) + b, then ReLU.  With feature dims padded to 128
        # lanes both matmul orders cost the same, so keep the GCNConv order.
        xw = jnp.dot(h.astype(jnp.bfloat16), w_ref[l],
                     preferred_element_type=jnp.float32)
        agg = jnp.dot(a_ref[...], xw.astype(jnp.bfloat16),
                      preferred_element_type=jnp.float32)
        h = jnp.maximum(agg + b_ref[l], 0.0)
        # F.dropout(..., training=False) == identity.
    out_ref[...] = h
    head_ref[...] = (
        jnp.dot(h.astype(jnp.bfloat16), lwt_ref[...],
                preferred_element_type=jnp.float32)
        + lb_ref[...]
    )


# ---------------------------------------------------------------------------
# One-time glue (hoisted out of the hot path): normalized adjacency + padded /
# stacked / transposed parameters.
# ---------------------------------------------------------------------------
def gcn_norm_adj(edge_index, num_nodes):
    """PyG gcn_norm with self-loops: A_hat = D^-1/2 (A + I) D^-1/2 (dense)."""
    src = edge_index[0]
    dst = edge_index[1]
    loop = jnp.arange(num_nodes, dtype=edge_index.dtype)
    src = jnp.concatenate([src, loop])
    dst = jnp.concatenate([dst, loop])
    A = jnp.zeros((num_nodes, num_nodes), jnp.float32).at[dst, src].add(1.0)
    deg = A.sum(axis=1)
    dinv = jnp.where(deg > 0, 1.0 / jnp.sqrt(deg), 0.0)
    return dinv[:, None] * A * dinv[None, :]


def prepare_tag(params, edge_index, num_nodes, num_features, h_dim):
    """Build padded bf16 A_hat, stacked padded bf16 weights, f32 biases, and
    the padded bf16 Linear W^T once per (graph, params)."""
    num_layers = len(params["gcn"])
    n_pad = _round_up(max(num_nodes, 8), LANE)
    f_pad = _round_up(max(num_features, h_dim, 1), LANE)

    A = gcn_norm_adj(edge_index, num_nodes)
    a_pad = (jnp.zeros((n_pad, n_pad), jnp.bfloat16)
             .at[:num_nodes, :num_nodes].set(A.astype(jnp.bfloat16)))

    w_stack = jnp.zeros((num_layers, f_pad, f_pad), jnp.bfloat16)
    b_stack = jnp.zeros((num_layers, 1, f_pad), jnp.float32)
    for l, (W, b) in enumerate(params["gcn"]):
        f_in, f_out = W.shape
        w_stack = w_stack.at[l, :f_in, :f_out].set(W.astype(jnp.bfloat16))
        b_stack = b_stack.at[l, 0, :f_out].set(b)

    lwt = (jnp.zeros((f_pad, f_pad), jnp.bfloat16)
           .at[:h_dim, :h_dim].set(params["lin_w"].T.astype(jnp.bfloat16)))
    lb = jnp.zeros((1, f_pad), jnp.float32).at[0, :h_dim].set(params["lin_b"])

    return {
        "a": a_pad, "w": w_stack, "b": b_stack, "lwt": lwt, "lb": lb,
        "n_pad": n_pad, "f_pad": f_pad, "h_dim": h_dim,
        "num_layers": num_layers, "num_nodes": num_nodes,
        "num_features": num_features,
    }


# ---------------------------------------------------------------------------
# Forward: pad x, one fused pallas_call, slice real rows/cols back out.
# ---------------------------------------------------------------------------
def tag_forward(prepared, x, edge_index=None, batch=None):
    del edge_index, batch  # adjacency is cached in `prepared`; batch unused
    N, f_in = x.shape
    n_pad = prepared["n_pad"]
    f_pad = prepared["f_pad"]
    h_dim = prepared["h_dim"]
    num_layers = prepared["num_layers"]

    x_pad = (jnp.zeros((n_pad, f_pad), jnp.bfloat16)
             .at[:N, :f_in].set(x.astype(jnp.bfloat16)))

    kernel = functools.partial(tag_fused_kernel, num_layers=num_layers)
    out_pad, head_pad = pl.pallas_call(
        kernel,
        grid=(1,),
        out_shape=(
            jax.ShapeDtypeStruct((n_pad, f_pad), jnp.float32),
            jax.ShapeDtypeStruct((n_pad, f_pad), jnp.float32),
        ),
        in_specs=[
            pl.BlockSpec((n_pad, n_pad), lambda i: (0, 0)),               # A_hat
            pl.BlockSpec((n_pad, f_pad), lambda i: (0, 0)),               # X
            pl.BlockSpec((num_layers, f_pad, f_pad), lambda i: (0, 0, 0)),  # W stack
            pl.BlockSpec((num_layers, 1, f_pad), lambda i: (0, 0, 0)),      # b stack
            pl.BlockSpec((f_pad, f_pad), lambda i: (0, 0)),               # lin W^T
            pl.BlockSpec((1, f_pad), lambda i: (0, 0)),                   # lin b
        ],
        out_specs=(
            pl.BlockSpec((n_pad, f_pad), lambda i: (0, 0)),
            pl.BlockSpec((n_pad, f_pad), lambda i: (0, 0)),
        ),
        compiler_params=pltpu.CompilerParams(
            dimension_semantics=("parallel",),
        ),
    )(prepared["a"], x_pad, prepared["w"], prepared["b"],
      prepared["lwt"], prepared["lb"])

    return out_pad[:N, :h_dim], head_pad[:N, :h_dim]


# ---------------------------------------------------------------------------
# Parameter init (matches the module: GCNConv layers + nn.Linear(h_dim, h_dim))
# ---------------------------------------------------------------------------
def init_params(key, num_features, h_dim, num_layers):
    params = {"gcn": []}
    for i in range(num_layers):
        h_in = num_features if i == 0 else h_dim
        key, kw, kb = jax.random.split(key, 3)
        W = jax.random.normal(kw, (h_in, h_dim), jnp.float32) * (1.0 / jnp.sqrt(h_in))
        b = jax.random.normal(kb, (h_dim,), jnp.float32) * 0.01
        params["gcn"].append((W, b))
    key, kw, kb = jax.random.split(key, 3)
    params["lin_w"] = jax.random.normal(kw, (h_dim, h_dim), jnp.float32) * (
        1.0 / jnp.sqrt(h_dim)
    )
    params["lin_b"] = jax.random.normal(kb, (h_dim,), jnp.float32) * 0.01
    return params


# ---------------------------------------------------------------------------
# Pure-JAX reference (f32) for a sanity check.
# ---------------------------------------------------------------------------
def tag_forward_ref(params, x, edge_index):
    A = gcn_norm_adj(edge_index, x.shape[0])
    out = x
    for (W, b) in params["gcn"]:
        out = jnp.maximum(A @ (out @ W) + b[None, :], 0.0)
    head = out @ params["lin_w"].T + params["lin_b"][None, :]
    return out, head


if __name__ == "__main__":
    key = jax.random.PRNGKey(0)

    # small shapes consistent with the module
    N = 16            # nodes
    NUM_FEATURES = 8  # input node-feature dim
    H_DIM = 32
    NUM_LAYERS = 2

    key, kx = jax.random.split(key)
    x = jax.random.normal(kx, (N, NUM_FEATURES), jnp.float32)

    # simple bidirectional ring graph
    i = jnp.arange(N, dtype=jnp.int32)
    src = jnp.concatenate([i, (i + 1) % N])
    dst = jnp.concatenate([(i + 1) % N, i])
    edge_index = jnp.stack([src, dst], axis=0)  # [2, 2N]

    # two graphs in the "batch" (unused by forward, kept for signature parity)
    batch = jnp.concatenate(
        [jnp.zeros(N // 2, jnp.int32), jnp.ones(N - N // 2, jnp.int32)]
    )

    params = init_params(key, NUM_FEATURES, H_DIM, NUM_LAYERS)

    # one-time preparation (adjacency normalization, padding, W^T) hoisted
    # out of the per-forward hot path
    prepared = prepare_tag(params, edge_index, N, NUM_FEATURES, H_DIM)

    out, head = tag_forward(prepared, x, edge_index, batch)
    jax.block_until_ready(out)
    jax.block_until_ready(head)

    assert out.shape == (N, H_DIM)
    assert head.shape == (N, H_DIM)

    # loose tolerance: kernel uses bf16 MXU inputs with f32 accumulation
    out_ref, head_ref = tag_forward_ref(params, x, edge_index)
    assert jnp.allclose(out, out_ref, rtol=1e-1, atol=1e-1)
    assert jnp.allclose(head, head_ref, rtol=1e-1, atol=1e-1)

    print("KERNEL_OK")
</pallas_src>

<mosaic_0001>
module attributes {stable_mosaic.version = 11 : i64} {
  func.func @tag_fused_kernel(%arg0: i32, %arg1: memref<128x128xbf16, #tpu.memory_space<vmem>>, %arg2: memref<128x128xbf16, #tpu.memory_space<vmem>>, %arg3: memref<2x128x128xbf16, #tpu.memory_space<vmem>>, %arg4: memref<2x1x128xf32, #tpu.memory_space<vmem>>, %arg5: memref<128x128xbf16, #tpu.memory_space<vmem>>, %arg6: memref<1x128xf32, #tpu.memory_space<vmem>>, %arg7: memref<128x128xf32, #tpu.memory_space<vmem>>, %arg8: memref<128x128xf32, #tpu.memory_space<vmem>>) attributes {dimension_semantics = [#tpu.dimension_semantics<parallel>], iteration_bounds = array<i64: 1>, scalar_prefetch = 0 : i64, scratch_operands = 0 : i64, tpu.core_type = #tpu.core_type<tc>, window_params = [{pipeline_mode = #tpu.pipeline_mode<synchronous>, transform_indices = @transform_0, window_bounds = array<i64: 128, 128>}, {pipeline_mode = #tpu.pipeline_mode<synchronous>, transform_indices = @transform_1, window_bounds = array<i64: 128, 128>}, {pipeline_mode = #tpu.pipeline_mode<synchronous>, transform_indices = @transform_2, window_bounds = array<i64: 2, 128, 128>}, {pipeline_mode = #tpu.pipeline_mode<synchronous>, transform_indices = @transform_3, window_bounds = array<i64: 2, 1, 128>}, {pipeline_mode = #tpu.pipeline_mode<synchronous>, transform_indices = @transform_4, window_bounds = array<i64: 128, 128>}, {pipeline_mode = #tpu.pipeline_mode<synchronous>, transform_indices = @transform_5, window_bounds = array<i64: 1, 128>}, {pipeline_mode = #tpu.pipeline_mode<synchronous>, transform_indices = @transform_6, window_bounds = array<i64: 128, 128>}, {pipeline_mode = #tpu.pipeline_mode<synchronous>, transform_indices = @transform_7, window_bounds = array<i64: 128, 128>}]} {
    %c0 = arith.constant 0 : index
    %c0_0 = arith.constant 0 : index
    %0 = vector.load %arg2[%c0, %c0_0] : memref<128x128xbf16, #tpu.memory_space<vmem>>, vector<128x128xbf16>
    %1 = arith.extf %0 : vector<128x128xbf16> to vector<128x128xf32>
    %2 = arith.truncf %1 : vector<128x128xf32> to vector<128x128xbf16>
    %c0_1 = arith.constant 0 : index
    %c0_2 = arith.constant 0 : index
    %c0_3 = arith.constant 0 : index
    %3 = vector.load %arg3[%c0_1, %c0_2, %c0_3] : memref<2x128x128xbf16, #tpu.memory_space<vmem>>, vector<1x128x128xbf16>
    %4 = vector.shape_cast %3 : vector<1x128x128xbf16> to vector<128x128xbf16>
    %cst = arith.constant dense<0.000000e+00> : vector<128x128xf32>
    %5 = tpu.matmul %2, %4, %cst {dimension_numbers = #tpu.dot_dimension_numbers<[1], [0], [0], [1], [0, 0, 1, 1], [], []>} : vector<128x128xbf16>, vector<128x128xbf16>, vector<128x128xf32> -> vector<128x128xf32>
    %c0_4 = arith.constant 0 : index
    %c0_5 = arith.constant 0 : index
    %6 = vector.load %arg1[%c0_4, %c0_5] : memref<128x128xbf16, #tpu.memory_space<vmem>>, vector<128x128xbf16>
    %7 = arith.truncf %5 : vector<128x128xf32> to vector<128x128xbf16>
    %cst_6 = arith.constant dense<0.000000e+00> : vector<128x128xf32>
    %8 = tpu.matmul %6, %7, %cst_6 {dimension_numbers = #tpu.dot_dimension_numbers<[1], [0], [0], [1], [0, 0, 1, 1], [], []>} : vector<128x128xbf16>, vector<128x128xbf16>, vector<128x128xf32> -> vector<128x128xf32>
    %c0_7 = arith.constant 0 : index
    %c0_8 = arith.constant 0 : index
    %c0_9 = arith.constant 0 : index
    %9 = vector.load %arg4[%c0_7, %c0_8, %c0_9] : memref<2x1x128xf32, #tpu.memory_space<vmem>>, vector<1x1x128xf32>
    %10 = vector.shape_cast %9 : vector<1x1x128xf32> to vector<1x128xf32>
    %11 = vector.broadcast %10 : vector<1x128xf32> to vector<128x128xf32>
    %12 = arith.addf %8, %11 : vector<128x128xf32>
    %cst_10 = arith.constant 0.000000e+00 : f32
    %13 = vector.broadcast %cst_10 : f32 to vector<128x128xf32>
    %14 = arith.maximumf %12, %13 : vector<128x128xf32>
    %15 = arith.truncf %14 : vector<128x128xf32> to vector<128x128xbf16>
    %c1 = arith.constant 1 : index
    %c0_11 = arith.constant 0 : index
    %c0_12 = arith.constant 0 : index
    %16 = vector.load %arg3[%c1, %c0_11, %c0_12] : memref<2x128x128xbf16, #tpu.memory_space<vmem>>, vector<1x128x128xbf16>
    %17 = vector.shape_cast %16 : vector<1x128x128xbf16> to vector<128x128xbf16>
    %cst_13 = arith.constant dense<0.000000e+00> : vector<128x128xf32>
    %18 = tpu.matmul %15, %17, %cst_13 {dimension_numbers = #tpu.dot_dimension_numbers<[1], [0], [0], [1], [0, 0, 1, 1], [], []>} : vector<128x128xbf16>, vector<128x128xbf16>, vector<128x128xf32> -> vector<128x128xf32>
    %c0_14 = arith.constant 0 : index
    %c0_15 = arith.constant 0 : index
    %19 = vector.load %arg1[%c0_14, %c0_15] : memref<128x128xbf16, #tpu.memory_space<vmem>>, vector<128x128xbf16>
    %20 = arith.truncf %18 : vector<128x128xf32> to vector<128x128xbf16>
    %cst_16 = arith.constant dense<0.000000e+00> : vector<128x128xf32>
    %21 = tpu.matmul %19, %20, %cst_16 {dimension_numbers = #tpu.dot_dimension_numbers<[1], [0], [0], [1], [0, 0, 1, 1], [], []>} : vector<128x128xbf16>, vector<128x128xbf16>, vector<128x128xf32> -> vector<128x128xf32>
    %c1_17 = arith.constant 1 : index
    %c0_18 = arith.constant 0 : index
    %c0_19 = arith.constant 0 : index
    %22 = vector.load %arg4[%c1_17, %c0_18, %c0_19] : memref<2x1x128xf32, #tpu.memory_space<vmem>>, vector<1x1x128xf32>
    %23 = vector.shape_cast %22 : vector<1x1x128xf32> to vector<1x128xf32>
    %24 = vector.broadcast %23 : vector<1x128xf32> to vector<128x128xf32>
    %25 = arith.addf %21, %24 : vector<128x128xf32>
    %cst_20 = arith.constant 0.000000e+00 : f32
    %26 = vector.broadcast %cst_20 : f32 to vector<128x128xf32>
    %27 = arith.maximumf %25, %26 : vector<128x128xf32>
    %c0_21 = arith.constant 0 : index
    %c0_22 = arith.constant 0 : index
    %28 = vector.load %arg7[%c0_21, %c0_22] : memref<128x128xf32, #tpu.memory_space<vmem>>, vector<128x128xf32>
    tpu.vector_store %arg7[%c0_21, %c0_22], %27 {strides = array<i32>} : memref<128x128xf32, #tpu.memory_space<vmem>>, vector<128x128xf32>,
    %29 = arith.truncf %27 : vector<128x128xf32> to vector<128x128xbf16>
    %c0_23 = arith.constant 0 : index
    %c0_24 = arith.constant 0 : index
    %30 = vector.load %arg5[%c0_23, %c0_24] : memref<128x128xbf16, #tpu.memory_space<vmem>>, vector<128x128xbf16>
    %cst_25 = arith.constant dense<0.000000e+00> : vector<128x128xf32>
    %31 = tpu.matmul %29, %30, %cst_25 {dimension_numbers = #tpu.dot_dimension_numbers<[1], [0], [0], [1], [0, 0, 1, 1], [], []>} : vector<128x128xbf16>, vector<128x128xbf16>, vector<128x128xf32> -> vector<128x128xf32>
    %c0_26 = arith.constant 0 : index
    %c0_27 = arith.constant 0 : index
    %32 = vector.load %arg6[%c0_26, %c0_27] : memref<1x128xf32, #tpu.memory_space<vmem>>, vector<1x128xf32>
    %33 = vector.broadcast %32 : vector<1x128xf32> to vector<128x128xf32>
    %34 = arith.addf %31, %33 : vector<128x128xf32>
    %c0_28 = arith.constant 0 : index
    %c0_29 = arith.constant 0 : index
    %35 = vector.load %arg8[%c0_28, %c0_29] : memref<128x128xf32, #tpu.memory_space<vmem>>, vector<128x128xf32>
    tpu.vector_store %arg8[%c0_28, %c0_29], %34 {strides = array<i32>} : memref<128x128xf32, #tpu.memory_space<vmem>>, vector<128x128xf32>,
    return
  }
  func.func @transform_0(%arg0: i32) -> (i32, i32) {
    %c0_i32 = arith.constant 0 : i32
    %c0_i32_0 = arith.constant 0 : i32
    %c0_i32_1 = arith.constant 0 : i32
    return %c0_i32, %c0_i32_0 : i32, i32
  }
  func.func @transform_1(%arg0: i32) -> (i32, i32) {
    %c0_i32 = arith.constant 0 : i32
    %c0_i32_0 = arith.constant 0 : i32
    %c0_i32_1 = arith.constant 0 : i32
    return %c0_i32, %c0_i32_0 : i32, i32
  }
  func.func @transform_2(%arg0: i32) -> (i32, i32, i32) {
    %c0_i32 = arith.constant 0 : i32
    %c0_i32_0 = arith.constant 0 : i32
    %c0_i32_1 = arith.constant 0 : i32
    %c0_i32_2 = arith.constant 0 : i32
    return %c0_i32, %c0_i32_0, %c0_i32_1 : i32, i32, i32
  }
  func.func @transform_3(%arg0: i32) -> (i32, i32, i32) {
    %c0_i32 = arith.constant 0 : i32
    %c0_i32_0 = arith.constant 0 : i32
    %c0_i32_1 = arith.constant 0 : i32
    %c0_i32_2 = arith.constant 0 : i32
    return %c0_i32, %c0_i32_0, %c0_i32_1 : i32, i32, i32
  }
  func.func @transform_4(%arg0: i32) -> (i32, i32) {
    %c0_i32 = arith.constant 0 : i32
    %c0_i32_0 = arith.constant 0 : i32
    %c0_i32_1 = arith.constant 0 : i32
    return %c0_i32, %c0_i32_0 : i32, i32
  }
  func.func @transform_5(%arg0: i32) -> (i32, i32) {
    %c0_i32 = arith.constant 0 : i32
    %c0_i32_0 = arith.constant 0 : i32
    %c0_i32_1 = arith.constant 0 : i32
    return %c0_i32, %c0_i32_0 : i32, i32
  }
  func.func @transform_6(%arg0: i32) -> (i32, i32) {
    %c0_i32 = arith.constant 0 : i32
    %c0_i32_0 = arith.constant 0 : i32
    %c0_i32_1 = arith.constant 0 : i32
    return %c0_i32, %c0_i32_0 : i32, i32
  }
  func.func @transform_7(%arg0: i32) -> (i32, i32) {
    %c0_i32 = arith.constant 0 : i32
    %c0_i32_0 = arith.constant 0 : i32
    %c0_i32_1 = arith.constant 0 : i32
    return %c0_i32, %c0_i32_0 : i32, i32
  }
}

</mosaic_0001>

<llo_original>
// kernel: tpu_custom_call.1
$region0: #{tpu_custom_call.1}
  #allocation0 [shape = 'u32[]', space=smem, size = 0x4, offset = 0x4, fixed_abs, tag = 'smem constant byte address 0x4 - core index']
  #allocation1 [shape = 'u32[144,128]{1,0:T(1,128)}', space=vmem, size = 0x12000, scoped, tag = 'internal scratch']
  %s0 = inlined_call_operand.hbm [shape: bf16[128,128], index: 0, kind: input, shape index: {}]
  %s1 = inlined_call_operand.hbm [shape: bf16[128,128], index: 1, kind: input, shape index: {}]
  %s2 = inlined_call_operand.hbm [shape: bf16[2,128,128], index: 2, kind: input, shape index: {}]
  %s3 = inlined_call_operand.vmem [shape: f32[2,1,128], index: 3, kind: input, shape index: {}]
  %s4 = inlined_call_operand.hbm [shape: bf16[128,128], index: 4, kind: input, shape index: {}]
  %s5 = inlined_call_operand.vmem [shape: f32[1,128], index: 5, kind: input, shape index: {}]
  %s6 = inlined_call_operand.hbm [shape: f32[128,128], index: 6, kind: output, shape index: {0}]
  %s7 = inlined_call_operand.hbm [shape: f32[128,128], index: 7, kind: output, shape index: {1}]
  %8 = xla_tuple %s6, %s7
  %s9 = sld [smem:[#allocation0]]
  $region58: #{tpu_custom_call.1} parent=0
    _
  %s11 = ssub.s32 1, %s9
  %s12 = scalar_select 0, %s11, %s9
  $region1: #{tpu_custom_call.1} parent=0
    #allocation2 [shape = 'u8[32768]{0}', space=vmem, size = 0x8000, scoped, tag = 'input window, operand 0, single buffered']
    #allocation3 [shape = 's32[1]{0}', space=sflag, size = 0x4, scoped, tag = 'scoped memory for tpu_custom_call.1']
    #allocation4 [shape = 's32[1]{0}', space=sflag, size = 0x4, scoped, tag = 'scoped memory for tpu_custom_call.1']
    #allocation5 [shape = 'u8[32768]{0}', space=vmem, size = 0x8000, scoped, tag = 'input window, operand 1, single buffered']
    #allocation6 [shape = 's32[1]{0}', space=sflag, size = 0x4, scoped, tag = 'scoped memory for tpu_custom_call.1']
    #allocation7 [shape = 'u8[65536]{0}', space=vmem, size = 0x10000, scoped, tag = 'input window, operand 2, single buffered']
    #allocation8 [shape = 'u8[32768]{0}', space=vmem, size = 0x8000, scoped, tag = 'input window, operand 4, single buffered']
    #allocation9 [shape = 's32[1]{0}', space=sflag, size = 0x4, scoped, tag = 'scoped memory for tpu_custom_call.1']
    #allocation10 [shape = 'u8[65536]{0}', space=vmem, size = 0x10000, scoped, tag = 'output window, operand 0, single buffered']
    #allocation11 [shape = 'u8[65536]{0}', space=vmem, size = 0x10000, scoped, tag = 'output window, operand 1, single buffered']
    #allocation12 [shape = 's32[1]{0}', space=sflag, size = 0x4, scoped, tag = 'scoped memory for tpu_custom_call.1']
    %13 = vsyncpa [#allocation3], 0
    %14 = vsyncpa [#allocation6], 0
    %15 = vsyncpa [#allocation9], 0
    %16 = vsyncpa [#allocation4], 0
    %17 = vsyncpa [#allocation12], 0
    // Predicated region
    $region2: #{tpu_custom_call.1} parent=1 // pred_check
      _
    $region3: #{tpu_custom_call.1} parent=1 // pred_check_branch
      %19 = sbr.rel (0) target = $region5
    $region4: #{tpu_custom_call.1} parent=1 // pred_region
      %s21 = ssub.s32 1024, 1024
      %22 = vsyncadd [#allocation3], %s21
      %s23 = sshll.u32 [#allocation2], 4
      %s24 = int_to_ptr.vmem [resolvable:$true] %s23
      %29 = dma.hbm_to_vmem [thread:$0]  %s0, 1024, %s24, [#allocation3], 64, 64, 4
    $region5: #{tpu_custom_call.1} parent=1 // pred_fallthru
      _
    // Predicated region
    $region6: #{tpu_custom_call.1} parent=1 // pred_check
      _
    $region7: #{tpu_custom_call.1} parent=1 // pred_check_branch
      %31 = sbr.rel (0) target = $region9
    $region8: #{tpu_custom_call.1} parent=1 // pred_region
      %s33 = ssub.s32 1024, 1024
      %34 = vsyncadd [#allocation6], %s33
      %s35 = sshll.u32 [#allocation5], 4
      %s36 = int_to_ptr.vmem [resolvable:$true] %s35
      %41 = dma.hbm_to_vmem [thread:$0]  %s1, 1024, %s36, [#allocation6], 64, 64, 4
    $region9: #{tpu_custom_call.1} parent=1 // pred_fallthru
      _
    // Predicated region
    $region10: #{tpu_custom_call.1} parent=1 // pred_check
      _
    $region11: #{tpu_custom_call.1} parent=1 // pred_check_branch
      %43 = sbr.rel (0) target = $region13
    $region12: #{tpu_custom_call.1} parent=1 // pred_region
      %s45 = ssub.s32 2048, 2048
      %46 = vsyncadd [#allocation6], %s45
      %s47 = sshll.u32 [#allocation7], 4
      %s48 = int_to_ptr.vmem [resolvable:$true] %s47
      %53 = dma.hbm_to_vmem [thread:$0]  %s2, 2048, %s48, [#allocation6], 64, 64, 4
    $region13: #{tpu_custom_call.1} parent=1 // pred_fallthru
      _
    // Predicated region
    $region14: #{tpu_custom_call.1} parent=1 // pred_check
      _
    $region15: #{tpu_custom_call.1} parent=1 // pred_check_branch
      %55 = sbr.rel (0) target = $region17
    $region16: #{tpu_custom_call.1} parent=1 // pred_region
      _
    $region17: #{tpu_custom_call.1} parent=1 // pred_fallthru
      _
    // Predicated region
    $region18: #{tpu_custom_call.1} parent=1 // pred_check
      _
    $region19: #{tpu_custom_call.1} parent=1 // pred_check_branch
      %57 = sbr.rel (0) target = $region21
    $region20: #{tpu_custom_call.1} parent=1 // pred_region
      %s59 = ssub.s32 1024, 1024
      %60 = vsyncadd [#allocation9], %s59
      %s61 = sshll.u32 [#allocation8], 4
      %s62 = int_to_ptr.vmem [resolvable:$true] %s61
      %67 = dma.hbm_to_vmem [thread:$0]  %s4, 1024, %s62, [#allocation9], 64, 64, 4
    $region21: #{tpu_custom_call.1} parent=1 // pred_fallthru
      _
    // Predicated region
    $region22: #{tpu_custom_call.1} parent=1 // pred_check
      _
    $region23: #{tpu_custom_call.1} parent=1 // pred_check_branch
      %69 = sbr.rel (0) target = $region25
    $region24: #{tpu_custom_call.1} parent=1 // pred_region
      _
    $region25: #{tpu_custom_call.1} parent=1 // pred_fallthru
      _
    // Predicated region
    $region26: #{tpu_custom_call.1} parent=1 // pred_check
      _
    $region27: #{tpu_custom_call.1} parent=1 // pred_check_branch
      %71 = sbr.rel (0) target = $region29
    $region28: #{tpu_custom_call.1} parent=1 // pred_region
      %72 = dma.done [#allocation3], 1024
    $region29: #{tpu_custom_call.1} parent=1 // pred_fallthru
      _
    // Predicated region
    $region30: #{tpu_custom_call.1} parent=1 // pred_check
      _
    $region31: #{tpu_custom_call.1} parent=1 // pred_check_branch
      %74 = sbr.rel (0) target = $region33
    $region32: #{tpu_custom_call.1} parent=1 // pred_region
      %75 = dma.done [#allocation6], 1024
    $region33: #{tpu_custom_call.1} parent=1 // pred_fallthru
      _
    // Predicated region
    $region34: #{tpu_custom_call.1} parent=1 // pred_check
      _
    $region35: #{tpu_custom_call.1} parent=1 // pred_check_branch
      %77 = sbr.rel (0) target = $region37
    $region36: #{tpu_custom_call.1} parent=1 // pred_region
      %78 = dma.done [#allocation6], 2048
    $region37: #{tpu_custom_call.1} parent=1 // pred_fallthru
      _
    // Predicated region
    $region38: #{tpu_custom_call.1} parent=1 // pred_check
      _
    $region39: #{tpu_custom_call.1} parent=1 // pred_check_branch
      %80 = sbr.rel (0) target = $region41
    $region40: #{tpu_custom_call.1} parent=1 // pred_region
      %81 = dma.done [#allocation9], 1024
    $region41: #{tpu_custom_call.1} parent=1 // pred_fallthru
      _
    %v83 = vld [vmem:[#allocation5] sm:$0xf]
    %v84 = vld [vmem:[#allocation5 + $0x4] sm:$0xf]
    %v85 = vld [vmem:[#allocation5 + $0x8] sm:$0xf]
    %v86 = vld [vmem:[#allocation5 + $0xc] sm:$0xf]
    %v87 = vld [vmem:[#allocation5 + $0x10] sm:$0xf]
    %v88 = vld [vmem:[#allocation5 + $0x14] sm:$0xf]
    %v89 = vld [vmem:[#allocation5 + $0x18] sm:$0xf]
    %v90 = vld [vmem:[#allocation5 + $0x1c] sm:$0xf]
    %v91 = vld [vmem:[#allocation5 + $0x20] sm:$0xf]
    %v92 = vld [vmem:[#allocation5 + $0x24] sm:$0xf]
    %v93 = vld [vmem:[#allocation5 + $0x28] sm:$0xf]
    %v94 = vld [vmem:[#allocation5 + $0x2c] sm:$0xf]
    %v95 = vld [vmem:[#allocation5 + $0x30] sm:$0xf]
    %v96 = vld [vmem:[#allocation5 + $0x34] sm:$0xf]
    %v97 = vld [vmem:[#allocation5 + $0x38] sm:$0xf]
    %v98 = vld [vmem:[#allocation5 + $0x3c] sm:$0xf]
    %v99 = vld [vmem:[#allocation7] sm:$0xf]
    %v100 = vld [vmem:[#allocation7 + $0x4] sm:$0xf]
    %v101 = vld [vmem:[#allocation7 + $0x8] sm:$0xf]
    %v102 = vld [vmem:[#allocation7 + $0xc] sm:$0xf]
    %v103 = vld [vmem:[#allocation7 + $0x10] sm:$0xf]
    %v104 = vld [vmem:[#allocation7 + $0x14] sm:$0xf]
    %v105 = vld [vmem:[#allocation7 + $0x18] sm:$0xf]
    %v106 = vld [vmem:[#allocation7 + $0x1c] sm:$0xf]
    %v107 = vld [vmem:[#allocation7 + $0x20] sm:$0xf]
    %v108 = vld [vmem:[#allocation7 + $0x24] sm:$0xf]
    %v109 = vld [vmem:[#allocation7 + $0x28] sm:$0xf]
    %v110 = vld [vmem:[#allocation7 + $0x2c] sm:$0xf]
    %v111 = vld [vmem:[#allocation7 + $0x30] sm:$0xf]
    %v112 = vld [vmem:[#allocation7 + $0x34] sm:$0xf]
    %v113 = vld [vmem:[#allocation7 + $0x38] sm:$0xf]
    %v114 = vld [vmem:[#allocation7 + $0x3c] sm:$0xf]
    %v131 = vunpack.c.l.b16 %v83
    %v132 = vunpack.c.l.b16 %v84
    %v133 = vunpack.c.l.b16 %v85
    %v134 = vunpack.c.l.b16 %v86
    %v135 = vunpack.c.l.b16 %v87
    %v136 = vunpack.c.l.b16 %v88
    %v137 = vunpack.c.l.b16 %v89
    %v138 = vunpack.c.l.b16 %v90
    %v139 = vunpack.c.l.b16 %v91
    %v140 = vunpack.c.l.b16 %v92
    %v141 = vunpack.c.l.b16 %v93
    %v142 = vunpack.c.l.b16 %v94
    %v143 = vunpack.c.l.b16 %v95
    %v144 = vunpack.c.l.b16 %v96
    %v145 = vunpack.c.l.b16 %v97
    %v146 = vunpack.c.l.b16 %v98
    %v147 = vpack.c.b16 %v132, %v131
    %v148 = vpack.c.b16 %v134, %v133
    %v149 = vpack.c.b16 %v136, %v135
    %v150 = vpack.c.b16 %v138, %v137
    %v151 = vpack.c.b16 %v140, %v139
    %v152 = vpack.c.b16 %v142, %v141
    %v153 = vpack.c.b16 %v144, %v143
    %v154 = vpack.c.b16 %v146, %v145
    %v179 = vunpack.c.l.b16 %v99
    %v180 = vunpack.c.l.b16 %v100
    %v181 = vunpack.c.l.b16 %v101
    %v182 = vunpack.c.l.b16 %v102
    %v183 = vunpack.c.l.b16 %v103
    %v184 = vunpack.c.l.b16 %v104
    %v185 = vunpack.c.l.b16 %v105
    %v186 = vunpack.c.l.b16 %v106
    %v187 = vunpack.c.l.b16 %v107
    %v188 = vunpack.c.l.b16 %v108
    %v189 = vunpack.c.l.b16 %v109
    %v190 = vunpack.c.l.b16 %v110
    %v191 = vunpack.c.l.b16 %v111
    %v192 = vunpack.c.l.b16 %v112
    %v193 = vunpack.c.l.b16 %v113
    %v194 = vunpack.c.l.b16 %v114
    %v195 = vpack.c.b16 %v180, %v179
    %v196 = vpack.c.b16 %v182, %v181
    %v197 = vpack.c.b16 %v184, %v183
    %v198 = vpack.c.b16 %v186, %v185
    %v199 = vpack.c.b16 %v188, %v187
    %v200 = vpack.c.b16 %v190, %v189
    %v201 = vpack.c.b16 %v192, %v191
    %v202 = vpack.c.b16 %v194, %v193
    %211 = vmatprep.subr.bf16.mxu0 0
    %212 = vmatpush1.bf16.msra.mxu0 %v202
    %213 = vmatprep.subr.bf16.mxu0 0
    %214 = vmatpush1.bf16.msra.mxu0 %v201
    %215 = vmatprep.subr.bf16.mxu0 0
    %216 = vmatpush1.bf16.msra.mxu0 %v200
    %217 = vmatprep.subr.bf16.mxu0 0
    %218 = vmatpush1.bf16.msra.mxu0 %v199
    %219 = vmatprep.subr.bf16.mxu0 0
    %220 = vmatpush1.bf16.msra.mxu0 %v198
    %221 = vmatprep.subr.bf16.mxu0 0
    %222 = vmatpush1.bf16.msra.mxu0 %v197
    %223 = vmatprep.subr.bf16.mxu0 0
    %224 = vmatpush1.bf16.msra.mxu0 %v196
    %225 = vmatprep.subr.bf16.mxu0 0
    %226 = vmatpush1.bf16.msra.mxu0 %v195
    %227 = vmatprep.subr.bf16.mxu0 0
    %228 = vmatpush2.bf16.msra.mxu0 0
    %229 = vmatprep.subr.bf16.mxu0 0
    %230 = vmatpush2.bf16.msra.mxu0 0
    %231 = vmatprep.subr.bf16.mxu0 0
    %232 = vmatpush2.bf16.msra.mxu0 0
    %233 = vmatprep.subr.bf16.mxu0 0
    %234 = vmatpush2.bf16.msra.mxu0 0
    %235 = vmatprep.subr.bf16.mxu0 0
    %236 = vmatpush2.bf16.msra.mxu0 0
    %237 = vmatprep.subr.bf16.mxu0 0
    %238 = vmatpush2.bf16.msra.mxu0 0
    %239 = vmatprep.subr.bf16.mxu0 0
    %240 = vmatpush2.bf16.msra.mxu0 0
    %241 = vmatprep.subr.bf16.mxu0 0
    %242 = vmatpush2.bf16.msra.mxu0 0
    %243 = vmatprep.mubr.bf16.mxu0 0
    %244 = vmatmul.mubr.bf16.gmra.mxu0 %v147
    %v245 = vpop.f32.mrf.mxu0
    %v246 = vadd.f32 0.0, %v245
    %v247 = vpop.f32.mrf.mxu0
    %v248 = vpop.f32.mrf.mxu0
    %v249 = vadd.f32 0.0, %v248
    %v250 = vpop.f32.mrf.mxu0
    %251 = vmatprep.mubr.bf16.mxu0 0
    %252 = vmatmul.mubr.bf16.gmra.mxu0 %v148
    %v253 = vpop.f32.mrf.mxu0
    %v254 = vadd.f32 0.0, %v253
    %v255 = vpop.f32.mrf.mxu0
    %v256 = vpop.f32.mrf.mxu0
    %v257 = vadd.f32 0.0, %v256
    %v258 = vpop.f32.mrf.mxu0
    %259 = vmatprep.mubr.bf16.mxu0 0
    %260 = vmatmul.mubr.bf16.gmra.mxu0 %v149
    %v261 = vpop.f32.mrf.mxu0
    %v262 = vadd.f32 0.0, %v261
    %v263 = vpop.f32.mrf.mxu0
    %v264 = vpop.f32.mrf.mxu0
    %v265 = vadd.f32 0.0, %v264
    %v266 = vpop.f32.mrf.mxu0
    %267 = vmatprep.mubr.bf16.mxu0 0
    %268 = vmatmul.mubr.bf16.gmra.mxu0 %v150
    %v269 = vpop.f32.mrf.mxu0
    %v270 = vadd.f32 0.0, %v269
    %v271 = vpop.f32.mrf.mxu0
    %v272 = vpop.f32.mrf.mxu0
    %v273 = vadd.f32 0.0, %v272
    %v274 = vpop.f32.mrf.mxu0
    %275 = vmatprep.mubr.bf16.mxu0 0
    %276 = vmatmul.mubr.bf16.gmra.mxu0 %v151
    %v277 = vpop.f32.mrf.mxu0
    %v278 = vadd.f32 0.0, %v277
    %v279 = vpop.f32.mrf.mxu0
    %v280 = vpop.f32.mrf.mxu0
    %v281 = vadd.f32 0.0, %v280
    %v282 = vpop.f32.mrf.mxu0
    %283 = vmatprep.mubr.bf16.mxu0 0
    %284 = vmatmul.mubr.bf16.gmra.mxu0 %v152
    %v285 = vpop.f32.mrf.mxu0
    %v286 = vadd.f32 0.0, %v285
    %v287 = vpop.f32.mrf.mxu0
    %v288 = vpop.f32.mrf.mxu0
    %v289 = vadd.f32 0.0, %v288
    %v290 = vpop.f32.mrf.mxu0
    %291 = vmatprep.mubr.bf16.mxu0 0
    %292 = vmatmul.mubr.bf16.gmra.mxu0 %v153
    %v293 = vpop.f32.mrf.mxu0
    %v294 = vadd.f32 0.0, %v293
    %v295 = vpop.f32.mrf.mxu0
    %v296 = vpop.f32.mrf.mxu0
    %v297 = vadd.f32 0.0, %v296
    %v298 = vpop.f32.mrf.mxu0
    %299 = vmatprep.mubr.bf16.mxu0 0
    %300 = vmatmul.mubr.bf16.gmra.mxu0 %v154
    %v301 = vpop.f32.mrf.mxu0
    %v302 = vadd.f32 0.0, %v301
    %v303 = vpop.f32.mrf.mxu0
    %v304 = vpop.f32.mrf.mxu0
    %v305 = vadd.f32 0.0, %v304
    %v306 = vpop.f32.mrf.mxu0
    %307 = vdwg.mxu0
    %v308 = vld [vmem:[#allocation2] sm:$0xf]
    %v309 = vld [vmem:[#allocation2 + $0x4] sm:$0xf]
    %v310 = vld [vmem:[#allocation2 + $0x8] sm:$0xf]
    %v311 = vld [vmem:[#allocation2 + $0xc] sm:$0xf]
    %v312 = vld [vmem:[#allocation2 + $0x10] sm:$0xf]
    %v313 = vld [vmem:[#allocation2 + $0x14] sm:$0xf]
    %v314 = vld [vmem:[#allocation2 + $0x18] sm:$0xf]
    %v315 = vld [vmem:[#allocation2 + $0x1c] sm:$0xf]
    %v316 = vld [vmem:[#allocation2 + $0x20] sm:$0xf]
    %v317 = vld [vmem:[#allocation2 + $0x24] sm:$0xf]
    %v318 = vld [vmem:[#allocation2 + $0x28] sm:$0xf]
    %v319 = vld [vmem:[#allocation2 + $0x2c] sm:$0xf]
    %v320 = vld [vmem:[#allocation2 + $0x30] sm:$0xf]
    %v321 = vld [vmem:[#allocation2 + $0x34] sm:$0xf]
    %v322 = vld [vmem:[#allocation2 + $0x38] sm:$0xf]
    %v323 = vld [vmem:[#allocation2 + $0x3c] sm:$0xf]
    %v324 = vpack.c.bf16 %v249, %v246
    %v325 = vpack.c.bf16 %v257, %v254
    %v326 = vpack.c.bf16 %v265, %v262
    %v327 = vpack.c.bf16 %v273, %v270
    %v328 = vpack.c.bf16 %v281, %v278
    %v329 = vpack.c.bf16 %v289, %v286
    %v330 = vpack.c.bf16 %v297, %v294
    %v331 = vpack.c.bf16 %v305, %v302
    %v332 = vld [vmem:[%s3] sm:$0x1]
    %v334 = vlaneseq
    %v335 = vshrl.u32 %v334, 7
    %v336 = vsub.s32 0, %v335
    %v337 = vrot.slane %v332, %v336
    %v355 = vunpack.c.l.b16 %v308
    %v356 = vunpack.c.l.b16 %v309
    %v357 = vunpack.c.l.b16 %v310
    %v358 = vunpack.c.l.b16 %v311
    %v359 = vunpack.c.l.b16 %v312
    %v360 = vunpack.c.l.b16 %v313
    %v361 = vunpack.c.l.b16 %v314
    %v362 = vunpack.c.l.b16 %v315
    %v363 = vunpack.c.l.b16 %v316
    %v364 = vunpack.c.l.b16 %v317
    %v365 = vunpack.c.l.b16 %v318
    %v366 = vunpack.c.l.b16 %v319
    %v367 = vunpack.c.l.b16 %v320
    %v368 = vunpack.c.l.b16 %v321
    %v369 = vunpack.c.l.b16 %v322
    %v370 = vunpack.c.l.b16 %v323
    %v371 = vpack.c.b16 %v356, %v355
    %v372 = vpack.c.b16 %v358, %v357
    %v373 = vpack.c.b16 %v360, %v359
    %v374 = vpack.c.b16 %v362, %v361
    %v375 = vpack.c.b16 %v364, %v363
    %v376 = vpack.c.b16 %v366, %v365
    %v377 = vpack.c.b16 %v368, %v367
    %v378 = vpack.c.b16 %v370, %v369
    %387 = vmatprep.subr.bf16.mxu0 0
    %388 = vmatpush1.bf16.msra.mxu0 %v331
    %389 = vmatprep.subr.bf16.mxu0 0
    %390 = vmatpush1.bf16.msra.mxu0 %v330
    %391 = vmatprep.subr.bf16.mxu0 0
    %392 = vmatpush1.bf16.msra.mxu0 %v329
    %393 = vmatprep.subr.bf16.mxu0 0
    %394 = vmatpush1.bf16.msra.mxu0 %v328
    %395 = vmatprep.subr.bf16.mxu0 0
    %396 = vmatpush1.bf16.msra.mxu0 %v327
    %397 = vmatprep.subr.bf16.mxu0 0
    %398 = vmatpush1.bf16.msra.mxu0 %v326
    %399 = vmatprep.subr.bf16.mxu0 0
    %400 = vmatpush1.bf16.msra.mxu0 %v325
    %401 = vmatprep.subr.bf16.mxu0 0
    %402 = vmatpush1.bf16.msra.mxu0 %v324
    %403 = vmatprep.subr.bf16.mxu0 0
    %404 = vmatpush2.bf16.msra.mxu0 0
    %405 = vmatprep.subr.bf16.mxu0 0
    %406 = vmatpush2.bf16.msra.mxu0 0
    %407 = vmatprep.subr.bf16.mxu0 0
    %408 = vmatpush2.bf16.msra.mxu0 0
    %409 = vmatprep.subr.bf16.mxu0 0
    %410 = vmatpush2.bf16.msra.mxu0 0
    %411 = vmatprep.subr.bf16.mxu0 0
    %412 = vmatpush2.bf16.msra.mxu0 0
    %413 = vmatprep.subr.bf16.mxu0 0
    %414 = vmatpush2.bf16.msra.mxu0 0
    %415 = vmatprep.subr.bf16.mxu0 0
    %416 = vmatpush2.bf16.msra.mxu0 0
    %417 = vmatprep.subr.bf16.mxu0 0
    %418 = vmatpush2.bf16.msra.mxu0 0
    %419 = vmatprep.mubr.bf16.mxu0 0
    %420 = vmatmul.mubr.bf16.gmra.mxu0 %v371
    %v421 = vpop.f32.mrf.mxu0
    %v422 = vadd.f32 %v337, %v421
    %v423 = vpop.f32.mrf.mxu0
    %v424 = vpop.f32.mrf.mxu0
    %v425 = vadd.f32 %v337, %v424
    %v426 = vpop.f32.mrf.mxu0
    %427 = vmatprep.mubr.bf16.mxu0 0
    %428 = vmatmul.mubr.bf16.gmra.mxu0 %v372
    %v429 = vpop.f32.mrf.mxu0
    %v430 = vadd.f32 %v337, %v429
    %v431 = vpop.f32.mrf.mxu0
    %v432 = vpop.f32.mrf.mxu0
    %v433 = vadd.f32 %v337, %v432
    %v434 = vpop.f32.mrf.mxu0
    %435 = vmatprep.mubr.bf16.mxu0 0
    %436 = vmatmul.mubr.bf16.gmra.mxu0 %v373
    %v437 = vpop.f32.mrf.mxu0
    %v438 = vadd.f32 %v337, %v437
    %v439 = vpop.f32.mrf.mxu0
    %v440 = vpop.f32.mrf.mxu0
    %v441 = vadd.f32 %v337, %v440
    %v442 = vpop.f32.mrf.mxu0
    %443 = vmatprep.mubr.bf16.mxu0 0
    %444 = vmatmul.mubr.bf16.gmra.mxu0 %v374
    %v445 = vpop.f32.mrf.mxu0
    %v446 = vadd.f32 %v337, %v445
    %v447 = vpop.f32.mrf.mxu0
    %v448 = vpop.f32.mrf.mxu0
    %v449 = vadd.f32 %v337, %v448
    %v450 = vpop.f32.mrf.mxu0
    %451 = vmatprep.mubr.bf16.mxu0 0
    %452 = vmatmul.mubr.bf16.gmra.mxu0 %v375
    %v453 = vpop.f32.mrf.mxu0
    %v454 = vadd.f32 %v337, %v453
    %v455 = vpop.f32.mrf.mxu0
    %v456 = vpop.f32.mrf.mxu0
    %v457 = vadd.f32 %v337, %v456
    %v458 = vpop.f32.mrf.mxu0
    %459 = vmatprep.mubr.bf16.mxu0 0
    %460 = vmatmul.mubr.bf16.gmra.mxu0 %v376
    %v461 = vpop.f32.mrf.mxu0
    %v462 = vadd.f32 %v337, %v461
    %v463 = vpop.f32.mrf.mxu0
    %v464 = vpop.f32.mrf.mxu0
    %v465 = vadd.f32 %v337, %v464
    %v466 = vpop.f32.mrf.mxu0
    %467 = vmatprep.mubr.bf16.mxu0 0
    %468 = vmatmul.mubr.bf16.gmra.mxu0 %v377
    %v469 = vpop.f32.mrf.mxu0
    %v470 = vadd.f32 %v337, %v469
    %v471 = vpop.f32.mrf.mxu0
    %v472 = vpop.f32.mrf.mxu0
    %v473 = vadd.f32 %v337, %v472
    %v474 = vpop.f32.mrf.mxu0
    %475 = vmatprep.mubr.bf16.mxu0 0
    %476 = vmatmul.mubr.bf16.gmra.mxu0 %v378
    %v477 = vpop.f32.mrf.mxu0
    %v478 = vadd.f32 %v337, %v477
    %v479 = vpop.f32.mrf.mxu0
    %v480 = vpop.f32.mrf.mxu0
    %v481 = vadd.f32 %v337, %v480
    %v482 = vpop.f32.mrf.mxu0
    %483 = vdwg.mxu0
    %v484 = vmax.f32 %v422, 0.0
    %v485 = vmax.f32 %v425, 0.0
    %v486 = vmax.f32 %v430, 0.0
    %v487 = vmax.f32 %v433, 0.0
    %v488 = vmax.f32 %v438, 0.0
    %v489 = vmax.f32 %v441, 0.0
    %v490 = vmax.f32 %v446, 0.0
    %v491 = vmax.f32 %v449, 0.0
    %v492 = vmax.f32 %v454, 0.0
    %v493 = vmax.f32 %v457, 0.0
    %v494 = vmax.f32 %v462, 0.0
    %v495 = vmax.f32 %v465, 0.0
    %v496 = vmax.f32 %v470, 0.0
    %v497 = vmax.f32 %v473, 0.0
    %v498 = vmax.f32 %v478, 0.0
    %v499 = vmax.f32 %v481, 0.0
    %v500 = vpack.c.bf16 %v485, %v484
    %v501 = vpack.c.bf16 %v487, %v486
    %v502 = vpack.c.bf16 %v489, %v488
    %v503 = vpack.c.bf16 %v491, %v490
    %v504 = vpack.c.bf16 %v493, %v492
    %v505 = vpack.c.bf16 %v495, %v494
    %v506 = vpack.c.bf16 %v497, %v496
    %v507 = vpack.c.bf16 %v499, %v498
    %s508 = scalar_lea.vmem [#allocation7], 64
    %v509 = vld [vmem:[%s508] sm:$0xf]
    %v510 = vld [vmem:[%s508 + $0x4] sm:$0xf]
    %v511 = vld [vmem:[%s508 + $0x8] sm:$0xf]
    %v512 = vld [vmem:[%s508 + $0xc] sm:$0xf]
    %v513 = vld [vmem:[%s508 + $0x10] sm:$0xf]
    %v514 = vld [vmem:[%s508 + $0x14] sm:$0xf]
    %v515 = vld [vmem:[%s508 + $0x18] sm:$0xf]
    %v516 = vld [vmem:[%s508 + $0x1c] sm:$0xf]
    %v517 = vld [vmem:[%s508 + $0x20] sm:$0xf]
    %v518 = vld [vmem:[%s508 + $0x24] sm:$0xf]
    %v519 = vld [vmem:[%s508 + $0x28] sm:$0xf]
    %v520 = vld [vmem:[%s508 + $0x2c] sm:$0xf]
    %v521 = vld [vmem:[%s508 + $0x30] sm:$0xf]
    %v522 = vld [vmem:[%s508 + $0x34] sm:$0xf]
    %v523 = vld [vmem:[%s508 + $0x38] sm:$0xf]
    %v524 = vld [vmem:[%s508 + $0x3c] sm:$0xf]
    %v541 = vunpack.c.l.b16 %v509
    %v542 = vunpack.c.l.b16 %v510
    %v543 = vunpack.c.l.b16 %v511
    %v544 = vunpack.c.l.b16 %v512
    %v545 = vunpack.c.l.b16 %v513
    %v546 = vunpack.c.l.b16 %v514
    %v547 = vunpack.c.l.b16 %v515
    %v548 = vunpack.c.l.b16 %v516
    %v549 = vunpack.c.l.b16 %v517
    %v550 = vunpack.c.l.b16 %v518
    %v551 = vunpack.c.l.b16 %v519
    %v552 = vunpack.c.l.b16 %v520
    %v553 = vunpack.c.l.b16 %v521
    %v554 = vunpack.c.l.b16 %v522
    %v555 = vunpack.c.l.b16 %v523
    %v556 = vunpack.c.l.b16 %v524
    %v557 = vpack.c.b16 %v542, %v541
    %v558 = vpack.c.b16 %v544, %v543
    %v559 = vpack.c.b16 %v546, %v545
    %v560 = vpack.c.b16 %v548, %v547
    %v561 = vpack.c.b16 %v550, %v549
    %v562 = vpack.c.b16 %v552, %v551
    %v563 = vpack.c.b16 %v554, %v553
    %v564 = vpack.c.b16 %v556, %v555
    %573 = vmatprep.subr.bf16.mxu0 0
    %574 = vmatpush1.bf16.msra.mxu0 %v564
    %575 = vmatprep.subr.bf16.mxu0 0
    %576 = vmatpush1.bf16.msra.mxu0 %v563
    %577 = vmatprep.subr.bf16.mxu0 0
    %578 = vmatpush1.bf16.msra.mxu0 %v562
    %579 = vmatprep.subr.bf16.mxu0 0
    %580 = vmatpush1.bf16.msra.mxu0 %v561
    %581 = vmatprep.subr.bf16.mxu0 0
    %582 = vmatpush1.bf16.msra.mxu0 %v560
    %583 = vmatprep.subr.bf16.mxu0 0
    %584 = vmatpush1.bf16.msra.mxu0 %v559
    %585 = vmatprep.subr.bf16.mxu0 0
    %586 = vmatpush1.bf16.msra.mxu0 %v558
    %587 = vmatprep.subr.bf16.mxu0 0
    %588 = vmatpush1.bf16.msra.mxu0 %v557
    %589 = vmatprep.subr.bf16.mxu0 0
    %590 = vmatpush2.bf16.msra.mxu0 0
    %591 = vmatprep.subr.bf16.mxu0 0
    %592 = vmatpush2.bf16.msra.mxu0 0
    %593 = vmatprep.subr.bf16.mxu0 0
    %594 = vmatpush2.bf16.msra.mxu0 0
    %595 = vmatprep.subr.bf16.mxu0 0
    %596 = vmatpush2.bf16.msra.mxu0 0
    %597 = vmatprep.subr.bf16.mxu0 0
    %598 = vmatpush2.bf16.msra.mxu0 0
    %599 = vmatprep.subr.bf16.mxu0 0
    %600 = vmatpush2.bf16.msra.mxu0 0
    %601 = vmatprep.subr.bf16.mxu0 0
    %602 = vmatpush2.bf16.msra.mxu0 0
    %603 = vmatprep.subr.bf16.mxu0 0
    %604 = vmatpush2.bf16.msra.mxu0 0
    %605 = vmatprep.mubr.bf16.mxu0 0
    %606 = vmatmul.mubr.bf16.gmra.mxu0 %v500
    %v607 = vpop.f32.mrf.mxu0
    %v608 = vadd.f32 0.0, %v607
    %v609 = vpop.f32.mrf.mxu0
    %v610 = vpop.f32.mrf.mxu0
    %v611 = vadd.f32 0.0, %v610
    %v612 = vpop.f32.mrf.mxu0
    %613 = vmatprep.mubr.bf16.mxu0 0
    %614 = vmatmul.mubr.bf16.gmra.mxu0 %v501
    %v615 = vpop.f32.mrf.mxu0
    %v616 = vadd.f32 0.0, %v615
    %v617 = vpop.f32.mrf.mxu0
    %v618 = vpop.f32.mrf.mxu0
    %v619 = vadd.f32 0.0, %v618
    %v620 = vpop.f32.mrf.mxu0
    %621 = vmatprep.mubr.bf16.mxu0 0
    %622 = vmatmul.mubr.bf16.gmra.mxu0 %v502
    %v623 = vpop.f32.mrf.mxu0
    %v624 = vadd.f32 0.0, %v623
    %v625 = vpop.f32.mrf.mxu0
    %v626 = vpop.f32.mrf.mxu0
    %v627 = vadd.f32 0.0, %v626
    %v628 = vpop.f32.mrf.mxu0
    %629 = vmatprep.mubr.bf16.mxu0 0
    %630 = vmatmul.mubr.bf16.gmra.mxu0 %v503
    %v631 = vpop.f32.mrf.mxu0
    %v632 = vadd.f32 0.0, %v631
    %v633 = vpop.f32.mrf.mxu0
    %v634 = vpop.f32.mrf.mxu0
    %v635 = vadd.f32 0.0, %v634
    %v636 = vpop.f32.mrf.mxu0
    %637 = vmatprep.mubr.bf16.mxu0 0
    %638 = vmatmul.mubr.bf16.gmra.mxu0 %v504
    %v639 = vpop.f32.mrf.mxu0
    %v640 = vadd.f32 0.0, %v639
    %v641 = vpop.f32.mrf.mxu0
    %v642 = vpop.f32.mrf.mxu0
    %v643 = vadd.f32 0.0, %v642
    %v644 = vpop.f32.mrf.mxu0
    %645 = vmatprep.mubr.bf16.mxu0 0
    %646 = vmatmul.mubr.bf16.gmra.mxu0 %v505
    %v647 = vpop.f32.mrf.mxu0
    %v648 = vadd.f32 0.0, %v647
    %v649 = vpop.f32.mrf.mxu0
    %v650 = vpop.f32.mrf.mxu0
    %v651 = vadd.f32 0.0, %v650
    %v652 = vpop.f32.mrf.mxu0
    %653 = vmatprep.mubr.bf16.mxu0 0
    %654 = vmatmul.mubr.bf16.gmra.mxu0 %v506
    %v655 = vpop.f32.mrf.mxu0
    %v656 = vadd.f32 0.0, %v655
    %v657 = vpop.f32.mrf.mxu0
    %v658 = vpop.f32.mrf.mxu0
    %v659 = vadd.f32 0.0, %v658
    %v660 = vpop.f32.mrf.mxu0
    %661 = vmatprep.mubr.bf16.mxu0 0
    %662 = vmatmul.mubr.bf16.gmra.mxu0 %v507
    %v663 = vpop.f32.mrf.mxu0
    %v664 = vadd.f32 0.0, %v663
    %v665 = vpop.f32.mrf.mxu0
    %v666 = vpop.f32.mrf.mxu0
    %v667 = vadd.f32 0.0, %v666
    %v668 = vpop.f32.mrf.mxu0
    %669 = vdwg.mxu0
    %v670 = vpack.c.bf16 %v611, %v608
    %v671 = vpack.c.bf16 %v619, %v616
    %v672 = vpack.c.bf16 %v627, %v624
    %v673 = vpack.c.bf16 %v635, %v632
    %v674 = vpack.c.bf16 %v643, %v640
    %v675 = vpack.c.bf16 %v651, %v648
    %v676 = vpack.c.bf16 %v659, %v656
    %v677 = vpack.c.bf16 %v667, %v664
    %s678 = scalar_lea.vmem %s3, 1
    %v679 = vld [vmem:[%s678] sm:$0x1]
    %v681 = vlaneseq
    %v682 = vshrl.u32 %v681, 7
    %v683 = vsub.s32 0, %v682
    %v684 = vrot.slane %v679, %v683
    %686 = vmatprep.subr.bf16.mxu0 0
    %687 = vmatpush1.bf16.msra.mxu0 %v677
    %688 = vmatprep.subr.bf16.mxu0 0
    %689 = vmatpush1.bf16.msra.mxu0 %v676
    %690 = vmatprep.subr.bf16.mxu0 0
    %691 = vmatpush1.bf16.msra.mxu0 %v675
    %692 = vmatprep.subr.bf16.mxu0 0
    %693 = vmatpush1.bf16.msra.mxu0 %v674
    %694 = vmatprep.subr.bf16.mxu0 0
    %695 = vmatpush1.bf16.msra.mxu0 %v673
    %696 = vmatprep.subr.bf16.mxu0 0
    %697 = vmatpush1.bf16.msra.mxu0 %v672
    %698 = vmatprep.subr.bf16.mxu0 0
    %699 = vmatpush1.bf16.msra.mxu0 %v671
    %700 = vmatprep.subr.bf16.mxu0 0
    %701 = vmatpush1.bf16.msra.mxu0 %v670
    %702 = vmatprep.subr.bf16.mxu0 0
    %703 = vmatpush2.bf16.msra.mxu0 0
    %704 = vmatprep.subr.bf16.mxu0 0
    %705 = vmatpush2.bf16.msra.mxu0 0
    %706 = vmatprep.subr.bf16.mxu0 0
    %707 = vmatpush2.bf16.msra.mxu0 0
    %708 = vmatprep.subr.bf16.mxu0 0
    %709 = vmatpush2.bf16.msra.mxu0 0
    %710 = vmatprep.subr.bf16.mxu0 0
    %711 = vmatpush2.bf16.msra.mxu0 0
    %712 = vmatprep.subr.bf16.mxu0 0
    %713 = vmatpush2.bf16.msra.mxu0 0
    %714 = vmatprep.subr.bf16.mxu0 0
    %715 = vmatpush2.bf16.msra.mxu0 0
    %716 = vmatprep.subr.bf16.mxu0 0
    %717 = vmatpush2.bf16.msra.mxu0 0
    %718 = vmatprep.mubr.bf16.mxu0 0
    %719 = vmatmul.mubr.bf16.gmra.mxu0 %v371
    %v720 = vpop.f32.mrf.mxu0
    %v721 = vadd.f32 %v684, %v720
    %v722 = vpop.f32.mrf.mxu0
    %v723 = vpop.f32.mrf.mxu0
    %v724 = vadd.f32 %v684, %v723
    %v725 = vpop.f32.mrf.mxu0
    %726 = vmatprep.mubr.bf16.mxu0 0
    %727 = vmatmul.mubr.bf16.gmra.mxu0 %v372
    %v728 = vpop.f32.mrf.mxu0
    %v729 = vadd.f32 %v684, %v728
    %v730 = vpop.f32.mrf.mxu0
    %v731 = vpop.f32.mrf.mxu0
    %v732 = vadd.f32 %v684, %v731
    %v733 = vpop.f32.mrf.mxu0
    %734 = vmatprep.mubr.bf16.mxu0 0
    %735 = vmatmul.mubr.bf16.gmra.mxu0 %v373
    %v736 = vpop.f32.mrf.mxu0
    %v737 = vadd.f32 %v684, %v736
    %v738 = vpop.f32.mrf.mxu0
    %v739 = vpop.f32.mrf.mxu0
    %v740 = vadd.f32 %v684, %v739
    %v741 = vpop.f32.mrf.mxu0
    %742 = vmatprep.mubr.bf16.mxu0 0
    %743 = vmatmul.mubr.bf16.gmra.mxu0 %v374
    %v744 = vpop.f32.mrf.mxu0
    %v745 = vadd.f32 %v684, %v744
    %v746 = vpop.f32.mrf.mxu0
    %v747 = vpop.f32.mrf.mxu0
    %v748 = vadd.f32 %v684, %v747
    %v749 = vpop.f32.mrf.mxu0
    %750 = vmatprep.mubr.bf16.mxu0 0
    %751 = vmatmul.mubr.bf16.gmra.mxu0 %v375
    %v752 = vpop.f32.mrf.mxu0
    %v753 = vadd.f32 %v684, %v752
    %v754 = vpop.f32.mrf.mxu0
    %v755 = vpop.f32.mrf.mxu0
    %v756 = vadd.f32 %v684, %v755
    %v757 = vpop.f32.mrf.mxu0
    %758 = vmatprep.mubr.bf16.mxu0 0
    %759 = vmatmul.mubr.bf16.gmra.mxu0 %v376
    %v760 = vpop.f32.mrf.mxu0
    %v761 = vadd.f32 %v684, %v760
    %v762 = vpop.f32.mrf.mxu0
    %v763 = vpop.f32.mrf.mxu0
    %v764 = vadd.f32 %v684, %v763
    %v765 = vpop.f32.mrf.mxu0
    %766 = vmatprep.mubr.bf16.mxu0 0
    %767 = vmatmul.mubr.bf16.gmra.mxu0 %v377
    %v768 = vpop.f32.mrf.mxu0
    %v769 = vadd.f32 %v684, %v768
    %v770 = vpop.f32.mrf.mxu0
    %v771 = vpop.f32.mrf.mxu0
    %v772 = vadd.f32 %v684, %v771
    %v773 = vpop.f32.mrf.mxu0
    %774 = vmatprep.mubr.bf16.mxu0 0
    %775 = vmatmul.mubr.bf16.gmra.mxu0 %v378
    %v776 = vpop.f32.mrf.mxu0
    %v777 = vadd.f32 %v684, %v776
    %v778 = vpop.f32.mrf.mxu0
    %v779 = vpop.f32.mrf.mxu0
    %v780 = vadd.f32 %v684, %v779
    %v781 = vpop.f32.mrf.mxu0
    %782 = vdwg.mxu0
    %v783 = vmax.f32 %v721, 0.0
    %v784 = vmax.f32 %v724, 0.0
    %v785 = vmax.f32 %v729, 0.0
    %v786 = vmax.f32 %v732, 0.0
    %v787 = vmax.f32 %v737, 0.0
    %v788 = vmax.f32 %v740, 0.0
    %v789 = vmax.f32 %v745, 0.0
    %v790 = vmax.f32 %v748, 0.0
    %v791 = vmax.f32 %v753, 0.0
    %v792 = vmax.f32 %v756, 0.0
    %v793 = vmax.f32 %v761, 0.0
    %v794 = vmax.f32 %v764, 0.0
    %v795 = vmax.f32 %v769, 0.0
    %v796 = vmax.f32 %v772, 0.0
    %v797 = vmax.f32 %v777, 0.0
    %v798 = vmax.f32 %v780, 0.0
    %799 = vst [vmem:[#allocation10] sm:$0xff] %v783
    %800 = vst [vmem:[#allocation10 + $0x8] sm:$0xff] %v784
    %801 = vst [vmem:[#allocation10 + $0x10] sm:$0xff] %v785
    %802 = vst [vmem:[#allocation10 + $0x18] sm:$0xff] %v786
    %803 = vst [vmem:[#allocation10 + $0x20] sm:$0xff] %v787
    %804 = vst [vmem:[#allocation10 + $0x28] sm:$0xff] %v788
    %805 = vst [vmem:[#allocation10 + $0x30] sm:$0xff] %v789
    %806 = vst [vmem:[#allocation10 + $0x38] sm:$0xff] %v790
    %807 = vst [vmem:[#allocation10 + $0x40] sm:$0xff] %v791
    %808 = vst [vmem:[#allocation10 + $0x48] sm:$0xff] %v792
    %809 = vst [vmem:[#allocation10 + $0x50] sm:$0xff] %v793
    %810 = vst [vmem:[#allocation10 + $0x58] sm:$0xff] %v794
    %811 = vst [vmem:[#allocation10 + $0x60] sm:$0xff] %v795
    %812 = vst [vmem:[#allocation10 + $0x68] sm:$0xff] %v796
    %813 = vst [vmem:[#allocation10 + $0x70] sm:$0xff] %v797
    %814 = vst [vmem:[#allocation10 + $0x78] sm:$0xff] %v798
    %v815 = vpack.c.bf16 %v784, %v783
    %v816 = vpack.c.bf16 %v786, %v785
    %v817 = vpack.c.bf16 %v788, %v787
    %v818 = vpack.c.bf16 %v790, %v789
    %v819 = vpack.c.bf16 %v792, %v791
    %v820 = vpack.c.bf16 %v794, %v793
    %v821 = vpack.c.bf16 %v796, %v795
    %v822 = vpack.c.bf16 %v798, %v797
    %v823 = vld [vmem:[#allocation8] sm:$0xf]
    %v824 = vld [vmem:[#allocation8 + $0x4] sm:$0xf]
    %v825 = vld [vmem:[#allocation8 + $0x8] sm:$0xf]
    %v826 = vld [vmem:[#allocation8 + $0xc] sm:$0xf]
    %v827 = vld [vmem:[#allocation8 + $0x10] sm:$0xf]
    %v828 = vld [vmem:[#allocation8 + $0x14] sm:$0xf]
    %v829 = vld [vmem:[#allocation8 + $0x18] sm:$0xf]
    %v830 = vld [vmem:[#allocation8 + $0x1c] sm:$0xf]
    %v831 = vld [vmem:[#allocation8 + $0x20] sm:$0xf]
    %v832 = vld [vmem:[#allocation8 + $0x24] sm:$0xf]
    %v833 = vld [vmem:[#allocation8 + $0x28] sm:$0xf]
    %v834 = vld [vmem:[#allocation8 + $0x2c] sm:$0xf]
    %v835 = vld [vmem:[#allocation8 + $0x30] sm:$0xf]
    %v836 = vld [vmem:[#allocation8 + $0x34] sm:$0xf]
    %v837 = vld [vmem:[#allocation8 + $0x38] sm:$0xf]
    %v838 = vld [vmem:[#allocation8 + $0x3c] sm:$0xf]
    %v839 = vld [vmem:[%s5] sm:$0x1]
    %v841 = vlaneseq
    %v842 = vshrl.u32 %v841, 7
    %v843 = vsub.s32 0, %v842
    %v844 = vrot.slane %v839, %v843
    %v862 = vunpack.c.l.b16 %v823
    %v863 = vunpack.c.l.b16 %v824
    %v864 = vunpack.c.l.b16 %v825
    %v865 = vunpack.c.l.b16 %v826
    %v866 = vunpack.c.l.b16 %v827
    %v867 = vunpack.c.l.b16 %v828
    %v868 = vunpack.c.l.b16 %v829
    %v869 = vunpack.c.l.b16 %v830
    %v870 = vunpack.c.l.b16 %v831
    %v871 = vunpack.c.l.b16 %v832
    %v872 = vunpack.c.l.b16 %v833
    %v873 = vunpack.c.l.b16 %v834
    %v874 = vunpack.c.l.b16 %v835
    %v875 = vunpack.c.l.b16 %v836
    %v876 = vunpack.c.l.b16 %v837
    %v877 = vunpack.c.l.b16 %v838
    %v878 = vpack.c.b16 %v863, %v862
    %v879 = vpack.c.b16 %v865, %v864
    %v880 = vpack.c.b16 %v867, %v866
    %v881 = vpack.c.b16 %v869, %v868
    %v882 = vpack.c.b16 %v871, %v870
    %v883 = vpack.c.b16 %v873, %v872
    %v884 = vpack.c.b16 %v875, %v874
    %v885 = vpack.c.b16 %v877, %v876
    %894 = vmatprep.subr.bf16.mxu0 0
    %895 = vmatpush1.bf16.msra.mxu0 %v885
    %896 = vmatprep.subr.bf16.mxu0 0
    %897 = vmatpush1.bf16.msra.mxu0 %v884
    %898 = vmatprep.subr.bf16.mxu0 0
    %899 = vmatpush1.bf16.msra.mxu0 %v883
    %900 = vmatprep.subr.bf16.mxu0 0
    %901 = vmatpush1.bf16.msra.mxu0 %v882
    %902 = vmatprep.subr.bf16.mxu0 0
    %903 = vmatpush1.bf16.msra.mxu0 %v881
    %904 = vmatprep.subr.bf16.mxu0 0
    %905 = vmatpush1.bf16.msra.mxu0 %v880
    %906 = vmatprep.subr.bf16.mxu0 0
    %907 = vmatpush1.bf16.msra.mxu0 %v879
    %908 = vmatprep.subr.bf16.mxu0 0
    %909 = vmatpush1.bf16.msra.mxu0 %v878
    %910 = vmatprep.subr.bf16.mxu0 0
    %911 = vmatpush2.bf16.msra.mxu0 0
    %912 = vmatprep.subr.bf16.mxu0 0
    %913 = vmatpush2.bf16.msra.mxu0 0
    %914 = vmatprep.subr.bf16.mxu0 0
    %915 = vmatpush2.bf16.msra.mxu0 0
    %916 = vmatprep.subr.bf16.mxu0 0
    %917 = vmatpush2.bf16.msra.mxu0 0
    %918 = vmatprep.subr.bf16.mxu0 0
    %919 = vmatpush2.bf16.msra.mxu0 0
    %920 = vmatprep.subr.bf16.mxu0 0
    %921 = vmatpush2.bf16.msra.mxu0 0
    %922 = vmatprep.subr.bf16.mxu0 0
    %923 = vmatpush2.bf16.msra.mxu0 0
    %924 = vmatprep.subr.bf16.mxu0 0
    %925 = vmatpush2.bf16.msra.mxu0 0
    %926 = vmatprep.mubr.bf16.mxu0 0
    %927 = vmatmul.mubr.bf16.gmra.mxu0 %v815
    %v928 = vpop.f32.mrf.mxu0
    %v929 = vadd.f32 %v844, %v928
    %v930 = vpop.f32.mrf.mxu0
    %v931 = vpop.f32.mrf.mxu0
    %v932 = vadd.f32 %v844, %v931
    %v933 = vpop.f32.mrf.mxu0
    %934 = vmatprep.mubr.bf16.mxu0 0
    %935 = vmatmul.mubr.bf16.gmra.mxu0 %v816
    %v936 = vpop.f32.mrf.mxu0
    %v937 = vadd.f32 %v844, %v936
    %v938 = vpop.f32.mrf.mxu0
    %v939 = vpop.f32.mrf.mxu0
    %v940 = vadd.f32 %v844, %v939
    %v941 = vpop.f32.mrf.mxu0
    %942 = vmatprep.mubr.bf16.mxu0 0
    %943 = vmatmul.mubr.bf16.gmra.mxu0 %v817
    %v944 = vpop.f32.mrf.mxu0
    %v945 = vadd.f32 %v844, %v944
    %v946 = vpop.f32.mrf.mxu0
    %v947 = vpop.f32.mrf.mxu0
    %v948 = vadd.f32 %v844, %v947
    %v949 = vpop.f32.mrf.mxu0
    %950 = vmatprep.mubr.bf16.mxu0 0
    %951 = vmatmul.mubr.bf16.gmra.mxu0 %v818
    %v952 = vpop.f32.mrf.mxu0
    %v953 = vadd.f32 %v844, %v952
    %v954 = vpop.f32.mrf.mxu0
    %v955 = vpop.f32.mrf.mxu0
    %v956 = vadd.f32 %v844, %v955
    %v957 = vpop.f32.mrf.mxu0
    %958 = vmatprep.mubr.bf16.mxu0 0
    %959 = vmatmul.mubr.bf16.gmra.mxu0 %v819
    %v960 = vpop.f32.mrf.mxu0
    %v961 = vadd.f32 %v844, %v960
    %v962 = vpop.f32.mrf.mxu0
    %v963 = vpop.f32.mrf.mxu0
    %v964 = vadd.f32 %v844, %v963
    %v965 = vpop.f32.mrf.mxu0
    %966 = vmatprep.mubr.bf16.mxu0 0
    %967 = vmatmul.mubr.bf16.gmra.mxu0 %v820
    %v968 = vpop.f32.mrf.mxu0
    %v969 = vadd.f32 %v844, %v968
    %v970 = vpop.f32.mrf.mxu0
    %v971 = vpop.f32.mrf.mxu0
    %v972 = vadd.f32 %v844, %v971
    %v973 = vpop.f32.mrf.mxu0
    %974 = vmatprep.mubr.bf16.mxu0 0
    %975 = vmatmul.mubr.bf16.gmra.mxu0 %v821
    %v976 = vpop.f32.mrf.mxu0
    %v977 = vadd.f32 %v844, %v976
    %v978 = vpop.f32.mrf.mxu0
    %v979 = vpop.f32.mrf.mxu0
    %v980 = vadd.f32 %v844, %v979
    %v981 = vpop.f32.mrf.mxu0
    %982 = vmatprep.mubr.bf16.mxu0 0
    %983 = vmatmul.mubr.bf16.gmra.mxu0 %v822
    %v984 = vpop.f32.mrf.mxu0
    %v985 = vadd.f32 %v844, %v984
    %v986 = vpop.f32.mrf.mxu0
    %v987 = vpop.f32.mrf.mxu0
    %v988 = vadd.f32 %v844, %v987
    %v989 = vpop.f32.mrf.mxu0
    %990 = vdwg.mxu0
    %991 = vst [vmem:[#allocation11] sm:$0xff] %v929
    %992 = vst [vmem:[#allocation11 + $0x8] sm:$0xff] %v932
    %993 = vst [vmem:[#allocation11 + $0x10] sm:$0xff] %v937
    %994 = vst [vmem:[#allocation11 + $0x18] sm:$0xff] %v940
    %995 = vst [vmem:[#allocation11 + $0x20] sm:$0xff] %v945
    %996 = vst [vmem:[#allocation11 + $0x28] sm:$0xff] %v948
    %997 = vst [vmem:[#allocation11 + $0x30] sm:$0xff] %v953
    %998 = vst [vmem:[#allocation11 + $0x38] sm:$0xff] %v956
    %999 = vst [vmem:[#allocation11 + $0x40] sm:$0xff] %v961
    %1000 = vst [vmem:[#allocation11 + $0x48] sm:$0xff] %v964
    %1001 = vst [vmem:[#allocation11 + $0x50] sm:$0xff] %v969
    %1002 = vst [vmem:[#allocation11 + $0x58] sm:$0xff] %v972
    %1003 = vst [vmem:[#allocation11 + $0x60] sm:$0xff] %v977
    %1004 = vst [vmem:[#allocation11 + $0x68] sm:$0xff] %v980
    %1005 = vst [vmem:[#allocation11 + $0x70] sm:$0xff] %v985
    %1006 = vst [vmem:[#allocation11 + $0x78] sm:$0xff] %v988
    // Predicated region
    $region42: #{tpu_custom_call.1} parent=1 // pred_check
      _
    $region43: #{tpu_custom_call.1} parent=1 // pred_check_branch
      %1008 = sbr.rel (0) target = $region45
    $region44: #{tpu_custom_call.1} parent=1 // pred_region
      %s1010 = ssub.s32 2048, 2048
      %1011 = vsyncadd [#allocation4], %s1010
      %s1012 = sshll.u32 [#allocation10], 4
      %s1013 = int_to_ptr.vmem [resolvable:$true] %s1012
      %1018 = dma.vmem_to_hbm [thread:$0]  %s1013, 2048, %s6, [#allocation4], 128, 128, 8
    $region45: #{tpu_custom_call.1} parent=1 // pred_fallthru
      _
    // Predicated region
    $region46: #{tpu_custom_call.1} parent=1 // pred_check
      _
    $region47: #{tpu_custom_call.1} parent=1 // pred_check_branch
      %1020 = sbr.rel (0) target = $region49
    $region48: #{tpu_custom_call.1} parent=1 // pred_region
      %s1022 = ssub.s32 2048, 2048
      %1023 = vsyncadd [#allocation12], %s1022
      %s1024 = sshll.u32 [#allocation11], 4
      %s1025 = int_to_ptr.vmem [resolvable:$true] %s1024
      %1030 = dma.vmem_to_hbm [thread:$0]  %s1025, 2048, %s7, [#allocation12], 128, 128, 8
    $region49: #{tpu_custom_call.1} parent=1 // pred_fallthru
      _
    // Predicated region
    $region50: #{tpu_custom_call.1} parent=1 // pred_check
      _
    $region51: #{tpu_custom_call.1} parent=1 // pred_check_branch
      %1032 = sbr.rel (0) target = $region53
    $region52: #{tpu_custom_call.1} parent=1 // pred_region
      %1033 = dma.done [#allocation4], 2048
    $region53: #{tpu_custom_call.1} parent=1 // pred_fallthru
      _
    // Predicated region
    $region54: #{tpu_custom_call.1} parent=1 // pred_check
      _
    $region55: #{tpu_custom_call.1} parent=1 // pred_check_branch
      %1035 = sbr.rel (0) target = $region57
    $region56: #{tpu_custom_call.1} parent=1 // pred_region
      %1036 = dma.done [#allocation12], 2048
    $region57: #{tpu_custom_call.1} parent=1 // pred_fallthru
      _
    %1037 = vsyncpa [#allocation3], 1
    %1038 = vsyncpa [#allocation6], 1
    %1039 = vsyncpa [#allocation9], 1
    %1040 = vsyncpa [#allocation4], 1
    %1041 = vsyncpa [#allocation12], 1

</llo_original>
